<compile_context>
chip_gen: v5e
topology: v5e:2x2
jax: 0.10.0
libtpu: 0.0.40
codegen_flags: <defaults>
</compile_context>

<pallas_src>
import math
from functools import partial

import jax
import jax.numpy as jnp
from jax import lax
from jax.experimental import pallas as pl
from jax.experimental.pallas import tpu as pltpu


def _round_up(x, m):
    return ((x + m - 1) // m) * m


def _vmem_limit_bytes():
    """~80% of physical VMEM per generation; conservative 48 MiB fallback."""
    try:
        cap = int(getattr(pltpu.get_tpu_info(), "vmem_capacity_bytes", 0))
    except Exception:
        cap = 0
    if cap <= 0:
        return 48 * 1024 * 1024          # safe on every generation
    return int(cap * 0.8)                # v7x: ~51 MiB, v5e/v6e: ~102 MiB


def _pick_bb(batch, s_pad, dim, mlp_dim, vmem_limit):
    """Sequences per grid step: fit next to double-buffered per-layer weights."""
    # bf16 per-layer weights (wqkv, wo, w1, w2), double-buffered along depth.
    weight_bytes = 2 * 2 * (3 * dim * dim + dim * dim + 2 * dim * mlp_dim)
    # Rough f32 working set per resident sequence (acc scratch, in/out blocks,
    # qkv, mlp hidden, attention scores/ctx).
    per_seq = 4 * s_pad * (9 * dim + 2 * mlp_dim + 2 * s_pad)
    budget = vmem_limit - weight_bytes - (6 << 20)
    bb_max = max(1, budget // max(per_seq, 1))
    bb = 1
    for cand in range(1, batch + 1):
        if batch % cand == 0 and cand <= bb_max:
            bb = cand
    return bb


# ----------------------------- in-kernel helpers ----------------------------

def _layernorm(v, g, b, eps=1e-5):
    # f32 VPU work (v5e has no bf16 VPU/EUP).
    mu = jnp.mean(v, axis=-1, keepdims=True)
    var = jnp.mean((v - mu) ** 2, axis=-1, keepdims=True)
    return (v - mu) * lax.rsqrt(var + eps) * g + b


def _gelu_exact(x):
    # PyTorch nn.GELU() default (erf-based, not tanh approximation).
    return 0.5 * x * (1.0 + lax.erf(x * (1.0 / math.sqrt(2.0))))


# ----------------------------- Pallas kernels ------------------------------

def _embed_kernel(patch_ref, w_ref, b_ref, cls_ref, pe_ref, out_ref):
    """Patch embedding + cls-token prepend + learned positional encoding.

    Writes directly into the (Bb, S_pad, D) output block: row 0 = cls token,
    rows 1..N = embedded patches, rows N+1..S_pad-1 = zeros (padding).
    """
    bb, n, pd = patch_ref.shape
    s_pad, d = out_ref.shape[1], out_ref.shape[2]
    p = patch_ref[...].reshape(bb * n, pd).astype(jnp.bfloat16)
    emb = jnp.dot(p, w_ref[...], preferred_element_type=jnp.float32) + b_ref[...]
    emb = emb.reshape(bb, n, d)
    pe = pe_ref[0]                                              # (s_pad, d) f32
    cls_row = cls_ref[0].astype(jnp.float32) + pe[0:1, :]       # (1, d)
    out_ref[:, pl.ds(0, 1), :] = jnp.broadcast_to(
        cls_row[None, :, :], (bb, 1, d)).astype(out_ref.dtype)
    out_ref[:, pl.ds(1, n), :] = (emb + pe[1:1 + n, :]).astype(out_ref.dtype)
    pad = s_pad - (n + 1)
    if pad > 0:
        out_ref[:, pl.ds(n + 1, pad), :] = jnp.zeros((bb, pad, d), out_ref.dtype)


def _encoder_stack_kernel(x_ref, wqkv_ref, wo_ref, w1_ref, w2_ref,
                          vecs_ref, bqkv_ref, b1_ref, out_ref, acc_ref,
                          *, heads, s_valid):
    """One pre-LN encoder layer per grid step; depth is the inner grid axis.

    The activation lives in acc_ref (VMEM scratch) across the whole depth
    loop: loaded from x_ref at layer 0, written to out_ref at the last layer.
    Padded key columns are masked in the softmax; padded query rows carry
    garbage but are sliced off in the wrapper.
    """
    layer = pl.program_id(1)

    @pl.when(layer == 0)
    def _():
        acc_ref[...] = x_ref[...].astype(jnp.float32)

    bb, s, d = acc_ref.shape
    dh = d // heads
    m = bb * s

    vecs = vecs_ref[0]                       # (8, d) f32 packed LN/bias rows
    ln1_g, ln1_b = vecs[0:1], vecs[1:2]
    ln2_g, ln2_b = vecs[2:3], vecs[3:4]
    bo, b2 = vecs[4:5], vecs[5:6]

    x = acc_ref[...].reshape(m, d)           # (m, d) f32 residual stream

    # ---- multi-head self-attention (pre-LN) --------------------------------
    x2b = _layernorm(x, ln1_g, ln1_b).astype(jnp.bfloat16)
    # Single fused (m, d) x (d, 3d) QKV projection (full-width MXU matmul);
    # the 1/sqrt(dh) query scale is folded into the Q columns of wqkv.
    qkv = jnp.dot(x2b, wqkv_ref[0], preferred_element_type=jnp.float32)
    qkv = (qkv + bqkv_ref[0]).reshape(bb, s, 3 * d)

    key_valid = lax.broadcasted_iota(jnp.int32, (1, 1, s), 2) < s_valid

    # Static unroll over heads (small head count; per-head work after QKV
    # fusion is just two small matmuls + softmax).  For 12+ heads a visible
    # fori_loop would bound live ranges.
    ctx_heads = []
    for h in range(heads):
        lo = h * dh
        q = qkv[:, :, lo:lo + dh]
        k = qkv[:, :, d + lo:d + lo + dh]
        v = qkv[:, :, 2 * d + lo:2 * d + lo + dh]
        sc = jnp.einsum('bqd,bkd->bqk', q.astype(jnp.bfloat16),
                        k.astype(jnp.bfloat16),
                        preferred_element_type=jnp.float32)     # (bb, s, s)
        sc = jnp.where(key_valid, sc, jnp.float32(-1e30))
        sc = sc - jnp.max(sc, axis=-1, keepdims=True)
        p = jnp.exp(sc)
        p = p * pl.reciprocal(jnp.sum(p, axis=-1, keepdims=True), approx=True)
        ctx_heads.append(jnp.einsum('bqk,bkd->bqd', p.astype(jnp.bfloat16),
                                    v.astype(jnp.bfloat16),
                                    preferred_element_type=jnp.float32))
    # Concatenate heads once and run ONE full-contraction output projection.
    ctx = jnp.concatenate(ctx_heads, axis=-1).reshape(m, d).astype(jnp.bfloat16)
    attn = jnp.dot(ctx, wo_ref[0], preferred_element_type=jnp.float32) + bo
    x = x + attn

    # ---- feed-forward (pre-LN) ---------------------------------------------
    x2b = _layernorm(x, ln2_g, ln2_b).astype(jnp.bfloat16)
    h1 = jnp.dot(x2b, w1_ref[0], preferred_element_type=jnp.float32) + b1_ref[0]
    h1 = _gelu_exact(h1)
    ff = jnp.dot(h1.astype(jnp.bfloat16), w2_ref[0],
                 preferred_element_type=jnp.float32) + b2
    x = x + ff

    acc_ref[...] = x.reshape(bb, s, d)

    @pl.when(layer == pl.num_programs(1) - 1)
    def _():
        out_ref[...] = x.reshape(bb, s, d).astype(out_ref.dtype)


# ----------------------------- pallas_call wrappers -------------------------

def patch_embed(patches, w, b, cls_tok, pe, *, s_pad, bb, vmem_limit):
    B, N, Pd = patches.shape
    D = w.shape[1]
    return pl.pallas_call(
        _embed_kernel,
        out_shape=jax.ShapeDtypeStruct((B, s_pad, D), jnp.float32),
        grid=(B // bb,),
        in_specs=[pl.BlockSpec((bb, N, Pd), lambda i: (i, 0, 0)),
                  pl.BlockSpec((Pd, D), lambda i: (0, 0)),
                  pl.BlockSpec((1, D), lambda i: (0, 0)),
                  pl.BlockSpec((1, 1, D), lambda i: (0, 0, 0)),
                  pl.BlockSpec((1, s_pad, D), lambda i: (0, 0, 0))],
        out_specs=pl.BlockSpec((bb, s_pad, D), lambda i: (i, 0, 0)),
        compiler_params=pltpu.CompilerParams(
            dimension_semantics=("parallel",),
            vmem_limit_bytes=vmem_limit),
    )(patches, w, b, cls_tok, pe)


def encoder_stack(x, p, *, heads, s_valid, bb, vmem_limit):
    B, S_pad, D = x.shape
    depth = p['wqkv'].shape[0]
    mlp = p['w1'].shape[-1]
    kernel = partial(_encoder_stack_kernel, heads=heads, s_valid=s_valid)
    return pl.pallas_call(
        kernel,
        out_shape=jax.ShapeDtypeStruct((B, S_pad, D), jnp.float32),
        grid=(B // bb, depth),
        in_specs=[
            pl.BlockSpec((bb, S_pad, D), lambda bi, l: (bi, 0, 0)),   # x
            pl.BlockSpec((1, D, 3 * D),  lambda bi, l: (l, 0, 0)),    # wqkv
            pl.BlockSpec((1, D, D),      lambda bi, l: (l, 0, 0)),    # wo
            pl.BlockSpec((1, D, mlp),    lambda bi, l: (l, 0, 0)),    # w1
            pl.BlockSpec((1, mlp, D),    lambda bi, l: (l, 0, 0)),    # w2
            pl.BlockSpec((1, 8, D),      lambda bi, l: (l, 0, 0)),    # packed LN/bias
            pl.BlockSpec((1, 1, 3 * D),  lambda bi, l: (l, 0, 0)),    # bqkv
            pl.BlockSpec((1, 1, mlp),    lambda bi, l: (l, 0, 0)),    # b1
        ],
        out_specs=pl.BlockSpec((bb, S_pad, D), lambda bi, l: (bi, 0, 0)),
        scratch_shapes=[pltpu.VMEM((bb, S_pad, D), jnp.float32)],
        compiler_params=pltpu.CompilerParams(
            dimension_semantics=("parallel", "arbitrary"),
            vmem_limit_bytes=vmem_limit),
    )(x, p['wqkv'], p['wo'], p['w1'], p['w2'], p['vecs'], p['bqkv'], p['b1'])


# ----------------------------- parameters & forward -------------------------

def init_vit_params(key, *, image_size, patch_size, dim, depth, heads,
                    mlp_dim, channels):
    assert image_size % patch_size == 0
    assert dim % heads == 0
    hh = image_size // patch_size
    num_patches = hh * hh
    patch_dim = channels * patch_size * patch_size
    dh = dim // heads
    q_scale = 1.0 / math.sqrt(dh)

    keys = jax.random.split(key, 3 + depth)

    def norm(k, shape, scale=0.02):
        return (scale * jax.random.normal(k, shape)).astype(jnp.float32)

    wqkv_l, wo_l, w1_l, w2_l, vecs_l, bqkv_l, b1_l = [], [], [], [], [], [], []
    for l in range(depth):
        lk = jax.random.split(keys[3 + l], 6)
        in_proj = norm(lk[0], (3 * dim, dim))            # PyTorch (3D, D) layout
        # Fold the 1/sqrt(dh) attention scale into Wq (and its zero bias).
        wq = in_proj[:dim].T * q_scale
        wk = in_proj[dim:2 * dim].T
        wv = in_proj[2 * dim:].T
        wqkv_l.append(jnp.concatenate([wq, wk, wv], axis=1))   # (D, 3D)
        wo_l.append(norm(lk[1], (dim, dim)).T)
        w1_l.append(norm(lk[2], (mlp_dim, dim)).T)             # x @ w1
        w2_l.append(norm(lk[4], (dim, mlp_dim)).T)             # h @ w2
        vecs_l.append(jnp.stack([
            jnp.ones((dim,), jnp.float32), jnp.zeros((dim,), jnp.float32),  # ln1
            jnp.ones((dim,), jnp.float32), jnp.zeros((dim,), jnp.float32),  # ln2
            jnp.zeros((dim,), jnp.float32),                                 # bo
            norm(lk[5], (dim,)),                                            # b2
            jnp.zeros((dim,), jnp.float32), jnp.zeros((dim,), jnp.float32), # pad
        ]))
        bqkv_l.append(jnp.zeros((1, 3 * dim), jnp.float32))    # MHA in_proj bias = 0
        b1_l.append(norm(lk[3], (1, mlp_dim)))

    return {
        # MXU weight matrices in bf16; element-wise params stay f32.
        'patch_w': norm(keys[0], (patch_dim, dim)).astype(jnp.bfloat16),
        'patch_b': jnp.zeros((1, dim), jnp.float32),
        'cls': jax.random.normal(keys[1], (1, 1, dim), dtype=jnp.float32),
        'pe': 0.02 * jax.random.normal(keys[2], (1, num_patches + 1, dim),
                                       dtype=jnp.float32),
        'wqkv': jnp.stack(wqkv_l).astype(jnp.bfloat16),   # (depth, D, 3D)
        'wo':   jnp.stack(wo_l).astype(jnp.bfloat16),     # (depth, D, D)
        'w1':   jnp.stack(w1_l).astype(jnp.bfloat16),     # (depth, D, mlp)
        'w2':   jnp.stack(w2_l).astype(jnp.bfloat16),     # (depth, mlp, D)
        'vecs': jnp.stack(vecs_l).astype(jnp.float32),    # (depth, 8, D)
        'bqkv': jnp.stack(bqkv_l).astype(jnp.float32),    # (depth, 1, 3D)
        'b1':   jnp.stack(b1_l).astype(jnp.float32),      # (depth, 1, mlp)
    }


def vit_forward(img, params, *, patch_size, heads, pool=None):
    """img: (B, C, H, W) f32 -> (B, num_patches+1, dim) or (B, dim) if pool=='cls'."""
    B, C, H, W = img.shape
    ph = pw = patch_size
    h, w = H // ph, W // pw
    # Rearrange 'b c (h p1) (w p2) -> b (h w) (p1 p2 c)'  (glue only)
    patches = img.reshape(B, C, h, ph, w, pw)
    patches = jnp.transpose(patches, (0, 2, 4, 3, 5, 1))
    patches = patches.reshape(B, h * w, ph * pw * C)

    N = h * w
    S = N + 1
    S_pad = max(8, _round_up(S, 8))       # (8,128) sublane-friendly sequence

    pe = params['pe']
    if pe.shape[1] < S_pad:               # pad the positional table once
        pe = jnp.pad(pe, ((0, 0), (0, S_pad - pe.shape[1]), (0, 0)))

    D = params['patch_w'].shape[1]
    mlp = params['w1'].shape[-1]
    vmem_limit = _vmem_limit_bytes()
    Bb = _pick_bb(B, S_pad, D, mlp, vmem_limit)

    x = patch_embed(patches, params['patch_w'], params['patch_b'],
                    params['cls'], pe, s_pad=S_pad, bb=Bb,
                    vmem_limit=vmem_limit)
    x = encoder_stack(x, params, heads=heads, s_valid=S, bb=Bb,
                      vmem_limit=vmem_limit)
    x = x[:, :S]                          # drop padded rows
    if pool == 'cls':
        x = x[:, 0]
    return x


# ----------------------------- pure-JAX reference ----------------------------

def _reference_forward(img, params, *, patch_size, heads):
    """f32 reference using the same stored (bf16-rounded) weights."""
    B, C, H, W = img.shape
    ph = pw = patch_size
    h, w = H // ph, W // pw
    patches = img.reshape(B, C, h, ph, w, pw)
    patches = jnp.transpose(patches, (0, 2, 4, 3, 5, 1)).reshape(
        B, h * w, ph * pw * C)
    x = patches @ params['patch_w'].astype(jnp.float32) + params['patch_b']
    D = x.shape[-1]
    cls = jnp.broadcast_to(params['cls'], (B, 1, D))
    x = jnp.concatenate([cls, x], axis=1)
    x = x + params['pe'][:, :x.shape[1]]
    dh = D // heads

    def ln(v, g, b, eps=1e-5):
        mu = v.mean(-1, keepdims=True)
        var = ((v - mu) ** 2).mean(-1, keepdims=True)
        return (v - mu) / jnp.sqrt(var + eps) * g + b

    for l in range(params['wqkv'].shape[0]):
        wqkv = params['wqkv'][l].astype(jnp.float32)
        wo = params['wo'][l].astype(jnp.float32)
        w1 = params['w1'][l].astype(jnp.float32)
        w2 = params['w2'][l].astype(jnp.float32)
        vecs, bqkv, b1 = params['vecs'][l], params['bqkv'][l], params['b1'][l]
        x2 = ln(x, vecs[0], vecs[1])
        qkv = x2 @ wqkv + bqkv
        q, k, v = jnp.split(qkv, 3, axis=-1)
        def split_heads(t):
            return t.reshape(B, -1, heads, dh).transpose(0, 2, 1, 3)
        qh, kh, vh = map(split_heads, (q, k, v))
        s = jnp.einsum('bhqd,bhkd->bhqk', qh, kh)   # scale folded into wqkv
        p = jax.nn.softmax(s, axis=-1)
        ctx = jnp.einsum('bhqk,bhkd->bhqd', p, vh)
        ctx = ctx.transpose(0, 2, 1, 3).reshape(B, -1, D)
        x = x + ctx @ wo + vecs[4]
        x2 = ln(x, vecs[2], vecs[3])
        hdn = x2 @ w1 + b1
        hdn = 0.5 * hdn * (1.0 + lax.erf(hdn / math.sqrt(2.0)))
        x = x + hdn @ w2 + vecs[5]
    return x


# ----------------------------- main ------------------------------------------

if __name__ == "__main__":
    B, C, IMG, P = 2, 4, 16, 4
    DIM, DEPTH, HEADS, MLP = 32, 2, 4, 64

    key = jax.random.PRNGKey(0)
    kx, kp = jax.random.split(key)
    img = jax.random.normal(kx, (B, C, IMG, IMG), dtype=jnp.float32)
    params = init_vit_params(kp, image_size=IMG, patch_size=P, dim=DIM,
                             depth=DEPTH, heads=HEADS, mlp_dim=MLP, channels=C)

    out = vit_forward(img, params, patch_size=P, heads=HEADS, pool=None)
    jax.block_until_ready(out)
    assert out.shape == (B, (IMG // P) ** 2 + 1, DIM), out.shape
    assert bool(jnp.all(jnp.isfinite(out)))

    # Loose-tolerance check vs. an f32 reference (bf16 matmuls + approx
    # reciprocal introduce small deviations).
    ref = _reference_forward(img, params, patch_size=P, heads=HEADS)
    err = float(jnp.max(jnp.abs(out - ref)))
    assert err < 1e-1, f"max abs err vs f32 reference: {err}"
    print("KERNEL_OK")
</pallas_src>

<mosaic_0001>
module attributes {stable_mosaic.version = 11 : i64} {
  func.func @_embed_kernel(%arg0: i32, %arg1: memref<2x16x64xf32, #tpu.memory_space<vmem>>, %arg2: memref<64x32xbf16, #tpu.memory_space<vmem>>, %arg3: memref<1x32xf32, #tpu.memory_space<vmem>>, %arg4: memref<1x1x32xf32, #tpu.memory_space<vmem>>, %arg5: memref<1x24x32xf32, #tpu.memory_space<vmem>>, %arg6: memref<2x24x32xf32, #tpu.memory_space<vmem>>) attributes {dimension_semantics = [#tpu.dimension_semantics<parallel>], iteration_bounds = array<i64: 1>, scalar_prefetch = 0 : i64, scratch_operands = 0 : i64, tpu.core_type = #tpu.core_type<tc>, window_params = [{transform_indices = @transform_0, window_bounds = array<i64: 2, 16, 64>}, {pipeline_mode = #tpu.pipeline_mode<synchronous>, transform_indices = @transform_1, window_bounds = array<i64: 64, 32>}, {pipeline_mode = #tpu.pipeline_mode<synchronous>, transform_indices = @transform_2, window_bounds = array<i64: 1, 32>}, {pipeline_mode = #tpu.pipeline_mode<synchronous>, transform_indices = @transform_3, window_bounds = array<i64: 1, 1, 32>}, {pipeline_mode = #tpu.pipeline_mode<synchronous>, transform_indices = @transform_4, window_bounds = array<i64: 1, 24, 32>}, {transform_indices = @transform_5, window_bounds = array<i64: 2, 24, 32>}]} {
    %c0 = arith.constant 0 : index
    %c0_0 = arith.constant 0 : index
    %c0_1 = arith.constant 0 : index
    %0 = vector.load %arg1[%c0, %c0_0, %c0_1] : memref<2x16x64xf32, #tpu.memory_space<vmem>>, vector<2x16x64xf32>
    %1 = vector.shape_cast %0 : vector<2x16x64xf32> to vector<32x64xf32>
    %2 = arith.truncf %1 : vector<32x64xf32> to vector<32x64xbf16>
    %c0_2 = arith.constant 0 : index
    %c0_3 = arith.constant 0 : index
    %3 = vector.load %arg2[%c0_2, %c0_3] : memref<64x32xbf16, #tpu.memory_space<vmem>>, vector<64x32xbf16>
    %cst = arith.constant dense<0.000000e+00> : vector<32x32xf32>
    %4 = tpu.matmul %2, %3, %cst {dimension_numbers = #tpu.dot_dimension_numbers<[1], [0], [0], [1], [0, 0, 1, 1], [], []>} : vector<32x64xbf16>, vector<64x32xbf16>, vector<32x32xf32> -> vector<32x32xf32>
    %c0_4 = arith.constant 0 : index
    %c0_5 = arith.constant 0 : index
    %5 = vector.load %arg3[%c0_4, %c0_5] : memref<1x32xf32, #tpu.memory_space<vmem>>, vector<1x32xf32>
    %6 = vector.broadcast %5 : vector<1x32xf32> to vector<32x32xf32>
    %7 = arith.addf %4, %6 : vector<32x32xf32>
    %8 = vector.shape_cast %7 : vector<32x32xf32> to vector<2x16x32xf32>
    %c0_6 = arith.constant 0 : index
    %c0_7 = arith.constant 0 : index
    %c0_8 = arith.constant 0 : index
    %9 = vector.load %arg5[%c0_6, %c0_7, %c0_8] : memref<1x24x32xf32, #tpu.memory_space<vmem>>, vector<1x24x32xf32>
    %10 = vector.shape_cast %9 : vector<1x24x32xf32> to vector<24x32xf32>
    %c0_9 = arith.constant 0 : index
    %c0_10 = arith.constant 0 : index
    %c0_11 = arith.constant 0 : index
    %11 = vector.load %arg4[%c0_9, %c0_10, %c0_11] : memref<1x1x32xf32, #tpu.memory_space<vmem>>, vector<1x1x32xf32>
    %12 = vector.shape_cast %11 : vector<1x1x32xf32> to vector<1x32xf32>
    %13 = vector.extract_strided_slice %10 {offsets = [0, 0], sizes = [1, 32], strides = [1, 1]} : vector<24x32xf32> to vector<1x32xf32>
    %14 = arith.addf %12, %13 : vector<1x32xf32>
    %15 = vector.shape_cast %14 : vector<1x32xf32> to vector<1x1x32xf32>
    %16 = vector.shape_cast %15 : vector<1x1x32xf32> to vector<1x1x32xf32>
    %17 = vector.broadcast %16 : vector<1x1x32xf32> to vector<2x1x32xf32>
    %c0_12 = arith.constant 0 : index
    %c0_13 = arith.constant 0 : index
    %c0_14 = arith.constant 0 : index
    %18 = vector.load %arg6[%c0_12, %c0_13, %c0_14] : memref<2x24x32xf32, #tpu.memory_space<vmem>>, vector<2x1x32xf32>
    tpu.vector_store %arg6[%c0_12, %c0_13, %c0_14], %17 {strides = array<i32>} : memref<2x24x32xf32, #tpu.memory_space<vmem>>, vector<2x1x32xf32>,
    %19 = vector.extract_strided_slice %10 {offsets = [1, 0], sizes = [16, 32], strides = [1, 1]} : vector<24x32xf32> to vector<16x32xf32>
    %20 = vector.shape_cast %19 : vector<16x32xf32> to vector<1x16x32xf32>
    %21 = vector.broadcast %20 : vector<1x16x32xf32> to vector<2x16x32xf32>
    %22 = arith.addf %8, %21 : vector<2x16x32xf32>
    %c0_15 = arith.constant 0 : index
    %c1 = arith.constant 1 : index
    %c0_16 = arith.constant 0 : index
    %23 = vector.load %arg6[%c0_15, %c1, %c0_16] : memref<2x24x32xf32, #tpu.memory_space<vmem>>, vector<2x16x32xf32>
    tpu.vector_store %arg6[%c0_15, %c1, %c0_16], %22 {strides = array<i32>} : memref<2x24x32xf32, #tpu.memory_space<vmem>>, vector<2x16x32xf32>,
    %cst_17 = arith.constant 0.000000e+00 : f32
    %24 = vector.broadcast %cst_17 : f32 to vector<2x7x32xf32>
    %c0_18 = arith.constant 0 : index
    %c17 = arith.constant 17 : index
    %c0_19 = arith.constant 0 : index
    %25 = vector.load %arg6[%c0_18, %c17, %c0_19] : memref<2x24x32xf32, #tpu.memory_space<vmem>>, vector<2x7x32xf32>
    tpu.vector_store %arg6[%c0_18, %c17, %c0_19], %24 {strides = array<i32>} : memref<2x24x32xf32, #tpu.memory_space<vmem>>, vector<2x7x32xf32>,
    return
  }
  func.func @transform_0(%arg0: i32) -> (i32, i32, i32) {
    %c0_i32 = arith.constant 0 : i32
    %c0_i32_0 = arith.constant 0 : i32
    %c0_i32_1 = arith.constant 0 : i32
    return %arg0, %c0_i32, %c0_i32_0 : i32, i32, i32
  }
  func.func @transform_1(%arg0: i32) -> (i32, i32) {
    %c0_i32 = arith.constant 0 : i32
    %c0_i32_0 = arith.constant 0 : i32
    %c0_i32_1 = arith.constant 0 : i32
    return %c0_i32, %c0_i32_0 : i32, i32
  }
  func.func @transform_2(%arg0: i32) -> (i32, i32) {
    %c0_i32 = arith.constant 0 : i32
    %c0_i32_0 = arith.constant 0 : i32
    %c0_i32_1 = arith.constant 0 : i32
    return %c0_i32, %c0_i32_0 : i32, i32
  }
  func.func @transform_3(%arg0: i32) -> (i32, i32, i32) {
    %c0_i32 = arith.constant 0 : i32
    %c0_i32_0 = arith.constant 0 : i32
    %c0_i32_1 = arith.constant 0 : i32
    %c0_i32_2 = arith.constant 0 : i32
    return %c0_i32, %c0_i32_0, %c0_i32_1 : i32, i32, i32
  }
  func.func @transform_4(%arg0: i32) -> (i32, i32, i32) {
    %c0_i32 = arith.constant 0 : i32
    %c0_i32_0 = arith.constant 0 : i32
    %c0_i32_1 = arith.constant 0 : i32
    %c0_i32_2 = arith.constant 0 : i32
    return %c0_i32, %c0_i32_0, %c0_i32_1 : i32, i32, i32
  }
  func.func @transform_5(%arg0: i32) -> (i32, i32, i32) {
    %c0_i32 = arith.constant 0 : i32
    %c0_i32_0 = arith.constant 0 : i32
    %c0_i32_1 = arith.constant 0 : i32
    return %arg0, %c0_i32, %c0_i32_0 : i32, i32, i32
  }
}

</mosaic_0001>

<llo_original>
// kernel: tpu_custom_call.1
$region0: #{tpu_custom_call.1}
  #allocation0 [shape = 'u32[]', space=smem, size = 0x4, offset = 0x4, fixed_abs, tag = 'smem constant byte address 0x4 - core index']
  #allocation1 [shape = 'u32[72,128]{1,0:T(1,128)}', space=vmem, size = 0x9000, scoped, tag = 'internal scratch']
  %s0 = inlined_call_operand.vmem [shape: f32[2,16,64], index: 0, kind: input, shape index: {}]
  %s1 = inlined_call_operand.vmem [shape: bf16[64,32], index: 1, kind: input, shape index: {}]
  %s2 = inlined_call_operand.vmem [shape: f32[1,32], index: 2, kind: input, shape index: {}]
  %s3 = inlined_call_operand.vmem [shape: f32[1,1,32], index: 3, kind: input, shape index: {}]
  %s4 = inlined_call_operand.hbm [shape: f32[1,24,32], index: 4, kind: input, shape index: {}]
  %s5 = inlined_call_operand.hbm [shape: f32[2,24,32], index: 5, kind: output, shape index: {}]
  %s6 = sld [smem:[#allocation0]]
  $region34: #{tpu_custom_call.1} parent=0
    _
  %s8 = ssub.s32 1, %s6
  %s9 = scalar_select 0, %s8, %s6
  $region1: #{tpu_custom_call.1} parent=0
    #allocation2 [shape = 'u8[12288]{0}', space=vmem, size = 0x3000, scoped, tag = 'input window, operand 4, single buffered']
    #allocation3 [shape = 's32[1]{0}', space=sflag, size = 0x4, scoped, tag = 'scoped memory for tpu_custom_call.1']
    #allocation4 [shape = 's32[1]{0}', space=sflag, size = 0x4, scoped, tag = 'scoped memory for tpu_custom_call.1']
    #allocation5 [shape = 'u8[24576]{0}', space=vmem, size = 0x6000, scoped, tag = 'output window, operand 0, single buffered']
    %10 = vsyncpa [#allocation3], 0
    %11 = vsyncpa [#allocation4], 0
    // Predicated region
    $region2: #{tpu_custom_call.1} parent=1 // pred_check
      _
    $region3: #{tpu_custom_call.1} parent=1 // pred_check_branch
      %13 = sbr.rel (0) target = $region5
    $region4: #{tpu_custom_call.1} parent=1 // pred_region
      _
    $region5: #{tpu_custom_call.1} parent=1 // pred_fallthru
      _
    // Predicated region
    $region6: #{tpu_custom_call.1} parent=1 // pred_check
      _
    $region7: #{tpu_custom_call.1} parent=1 // pred_check_branch
      %15 = sbr.rel (0) target = $region9
    $region8: #{tpu_custom_call.1} parent=1 // pred_region
      _
    $region9: #{tpu_custom_call.1} parent=1 // pred_fallthru
      _
    // Predicated region
    $region10: #{tpu_custom_call.1} parent=1 // pred_check
      _
    $region11: #{tpu_custom_call.1} parent=1 // pred_check_branch
      %17 = sbr.rel (0) target = $region13
    $region12: #{tpu_custom_call.1} parent=1 // pred_region
      _
    $region13: #{tpu_custom_call.1} parent=1 // pred_fallthru
      _
    // Predicated region
    $region14: #{tpu_custom_call.1} parent=1 // pred_check
      _
    $region15: #{tpu_custom_call.1} parent=1 // pred_check_branch
      %19 = sbr.rel (0) target = $region17
    $region16: #{tpu_custom_call.1} parent=1 // pred_region
      _
    $region17: #{tpu_custom_call.1} parent=1 // pred_fallthru
      _
    // Predicated region
    $region18: #{tpu_custom_call.1} parent=1 // pred_check
      _
    $region19: #{tpu_custom_call.1} parent=1 // pred_check_branch
      %21 = sbr.rel (0) target = $region21
    $region20: #{tpu_custom_call.1} parent=1 // pred_region
      %23 = vsyncadd [#allocation3], 0
      %s24 = sshll.u32 %s4, 4
      %s25 = int_to_ptr.hbm [resolvable:$true] %s24
      %s26 = sshll.u32 [#allocation2], 4
      %s27 = int_to_ptr.vmem [resolvable:$true] %s26
      %32 = dma.hbm_to_vmem [thread:$0]  %s25, 384, %s27, [#allocation3], 128, 128, 8
    $region21: #{tpu_custom_call.1} parent=1 // pred_fallthru
      _
    // Predicated region
    $region22: #{tpu_custom_call.1} parent=1 // pred_check
      _
    $region23: #{tpu_custom_call.1} parent=1 // pred_check_branch
      %34 = sbr.rel (0) target = $region25
    $region24: #{tpu_custom_call.1} parent=1 // pred_region
      %36 = dma.done [#allocation3], 384
    $region25: #{tpu_custom_call.1} parent=1 // pred_fallthru
      _
    %v38 = vld [vmem:[%s0] sm:$0xff]
    %v39 = vld [vmem:[%s0 + $0x8] sm:$0xff]
    %v40 = vld [vmem:[%s0 + $0x10] sm:$0xff]
    %v41 = vld [vmem:[%s0 + $0x18] sm:$0xff]
    %v42 = vpack.c.bf16 %v39, %v38
    %v43 = vpack.c.bf16 %v41, %v40
    %v44 = vld [vmem:[%s1] sm:$0xf]
    %v45 = vld [vmem:[%s1 + $0x4] sm:$0xf]
    %v46 = vld [vmem:[%s1 + $0x8] sm:$0xf]
    %v47 = vld [vmem:[%s1 + $0xc] sm:$0xf]
    %v48 = vld [vmem:[%s1 + $0x10] sm:$0xf]
    %v49 = vld [vmem:[%s1 + $0x14] sm:$0xf]
    %v50 = vld [vmem:[%s1 + $0x18] sm:$0xf]
    %v51 = vld [vmem:[%s1 + $0x1c] sm:$0xf]
    %v52 = vld [vmem:[%s2] sm:$0x1]
    %v54 = vperm.slane %v52, 0
    %v64 = vunpack.c.l.b16 %v44
    %v65 = vunpack.c.l.b16 %v45
    %v66 = vunpack.c.l.b16 %v46
    %v67 = vunpack.c.l.b16 %v47
    %v68 = vunpack.c.l.b16 %v48
    %v69 = vunpack.c.l.b16 %v49
    %v70 = vunpack.c.l.b16 %v50
    %v71 = vunpack.c.l.b16 %v51
    %v72 = vpack.c.b16 %v65, %v64
    %v73 = vpack.c.b16 %v67, %v66
    %v74 = vpack.c.b16 %v69, %v68
    %v75 = vpack.c.b16 %v71, %v70
    %vm80 = vcmask 523264
    %v82 = vsel %vm80, %v42, 0
    %v85 = vsel %vm80, %v43, 0
    %87 = vmatpush.bf16.msra.mxu0 0
    %88 = vmatpush.bf16.msra.mxu0 0
    %89 = vmatpush.bf16.msra.mxu0 0
    %90 = vmatpush.bf16.msra.mxu0 0
    %91 = vmatpush.bf16.msra.mxu0 %v75
    %92 = vmatpush.bf16.msra.mxu0 %v74
    %93 = vmatpush.bf16.msra.mxu0 %v73
    %94 = vmatpush.bf16.msra.mxu0 %v72
    %95 = vmatmul.bf16.gmra.mxu0 %v82
    %v96 = vpop.f32.mrf.mxu0
    %v97 = vadd.f32 %v54, %v96
    %v98 = vpop.f32.mrf.mxu0
    %v99 = vadd.f32 %v54, %v98
    %100 = vmatmul.bf16.gmra.mxu0 %v85
    %v101 = vpop.f32.mrf.mxu0
    %v102 = vadd.f32 %v54, %v101
    %v103 = vpop.f32.mrf.mxu0
    %v104 = vadd.f32 %v54, %v103
    %105 = vdwg.mxu0
    %v106 = vld [vmem:[#allocation2] sm:$0xff]
    %v107 = vld [vmem:[#allocation2 + $0x8] sm:$0xff]
    %v108 = vld [vmem:[#allocation2 + $0x10] sm:$0xff]
    %v109 = vld [vmem:[%s3] sm:$0x1]
    %v110 = vadd.f32 %v109, %v106
    %vm111 = vcmask 253952
    %112 = vst.msk [vmem:[#allocation5] sm:$0x1] %vm111, %v110
    %113 = vst.msk [vmem:[#allocation5 + $0x18] sm:$0x1] %vm111, %v110
    %vm117 = vcmask 1046528
    %v118 = vrot.slane %v106, 1
    %v119 = vrot.slane %v107, 1
    %v120 = vsel %vm117, %v118, %v119
    %v121 = vrot.slane %v108, 1
    %v122 = vsel %vm117, %v119, %v121
    %v125 = vadd.f32 %v97, %v120
    %v126 = vadd.f32 %v99, %v122
    %v127 = vadd.f32 %v102, %v120
    %v128 = vadd.f32 %v104, %v122
    %vm129 = vcmask 261120
    %130 = vst.msk [vmem:[#allocation5 + $0x1] sm:$0xff] %vm129, %v125
    %131 = vst.msk [vmem:[#allocation5 + $0x9] sm:$0xff] %vm129, %v126
    %132 = vst.msk [vmem:[#allocation5 + $0x19] sm:$0xff] %vm129, %v127
    %133 = vst.msk [vmem:[#allocation5 + $0x21] sm:$0xff] %vm129, %v128
    %vm134 = vcmask 260096
    %135 = vst.msk [vmem:[#allocation5 + $0x11] sm:$0x7f] %vm134, 0.0
    %136 = vst.msk [vmem:[#allocation5 + $0x29] sm:$0x7f] %vm134, 0.0
    // Predicated region
    $region26: #{tpu_custom_call.1} parent=1 // pred_check
      _
    $region27: #{tpu_custom_call.1} parent=1 // pred_check_branch
      %138 = sbr.rel (0) target = $region29
    $region28: #{tpu_custom_call.1} parent=1 // pred_region
      %140 = vsyncadd [#allocation4], 0
      %s141 = sshll.u32 [#allocation5], 4
      %s142 = int_to_ptr.vmem [resolvable:$true] %s141
      %s143 = sshll.u32 %s5, 4
      %s144 = int_to_ptr.hbm [resolvable:$true] %s143
      %149 = dma.vmem_to_hbm [thread:$0]  %s142, 768, %s144, [#allocation4], 128, 128, 8
    $region29: #{tpu_custom_call.1} parent=1 // pred_fallthru
      _
    // Predicated region
    $region30: #{tpu_custom_call.1} parent=1 // pred_check
      _
    $region31: #{tpu_custom_call.1} parent=1 // pred_check_branch
      %151 = sbr.rel (0) target = $region33
    $region32: #{tpu_custom_call.1} parent=1 // pred_region
      %153 = dma.done [#allocation4], 768
    $region33: #{tpu_custom_call.1} parent=1 // pred_fallthru
      _
    %154 = vsyncpa [#allocation3], 1
    %155 = vsyncpa [#allocation4], 1

</llo_original>
